<compile_context>
chip_gen: v5e
topology: v5e:2x2
jax: 0.10.0
libtpu: 0.0.40
codegen_flags: <defaults>
</compile_context>

<pallas_src>
import functools

import jax
import jax.numpy as jnp
from jax.experimental import pallas as pl
from jax.experimental.pallas import tpu as pltpu

LANE = 128


def _round_up(x, m):
    return ((x + m - 1) // m) * m


# ----------------------------- Pallas kernel ------------------------------

def _qvalue_kernel(xu_ref, w1_ref, b1_ref, w2_ref, b2_ref, w3_ref, b3_ref,
                   out_ref):
    """One batch tile: Linear -> tanh -> Linear -> tanh -> Linear.

    Matmuls: bf16 inputs, f32 accumulation (MXU). Bias add + tanh: f32
    (VPU/EUP). Output: lane-dense (TB, 128) f32 slab, column 0 = Q value.
    """
    xu = xu_ref[...]                                                # (TB, Dp) bf16

    h = jnp.dot(xu, w1_ref[...],
                preferred_element_type=jnp.float32) + b1_ref[...]   # (TB, Hp) f32
    h = jnp.tanh(h)

    h = jnp.dot(h.astype(jnp.bfloat16), w2_ref[...],
                preferred_element_type=jnp.float32) + b2_ref[...]   # (TB, Hp) f32
    h = jnp.tanh(h)

    out_ref[...] = (jnp.dot(h.astype(jnp.bfloat16), w3_ref[...],
                            preferred_element_type=jnp.float32)
                    + b3_ref[...])                                  # (TB, 128) f32


# ----------------------------- wrapper ------------------------------------

@functools.partial(jax.jit, static_argnames=("block_b",))
def qvalue_forward(obs, act, params, block_b=256):
    """params: w1 (D,H), b1 (1,H), w2 (H,H), b2 (1,H), w3 (H,1), b3 (1,1).

    Weights are stored (in, out), i.e. transposed vs. PyTorch's (out, in).
    """
    xu = jnp.concatenate(
        [obs.astype(jnp.float32), act.astype(jnp.float32)], axis=-1)
    B, D = xu.shape
    H = params["w1"].shape[1]

    # Pad all feature dims to lane width; pad batch to the tile size.
    Dp = _round_up(D, LANE)
    Hp = _round_up(H, LANE)
    Op = LANE                                   # lane-dense padded output width
    TB = _round_up(min(block_b, _round_up(B, 16)), 16)   # bf16 sublane packing
    Bp = _round_up(B, TB)

    # Zero padding is exact here: padded weight rows/cols and biases are 0,
    # and tanh(0) == 0, so padded hidden columns stay 0 through every layer.
    xu_p = jnp.zeros((Bp, Dp), jnp.bfloat16).at[:B, :D].set(
        xu.astype(jnp.bfloat16))
    w1 = jnp.zeros((Dp, Hp), jnp.bfloat16).at[:D, :H].set(
        params["w1"].astype(jnp.bfloat16))
    b1 = jnp.zeros((1, Hp), jnp.float32).at[:, :H].set(params["b1"])
    w2 = jnp.zeros((Hp, Hp), jnp.bfloat16).at[:H, :H].set(
        params["w2"].astype(jnp.bfloat16))
    b2 = jnp.zeros((1, Hp), jnp.float32).at[:, :H].set(params["b2"])
    w3 = jnp.zeros((Hp, Op), jnp.bfloat16).at[:H, :1].set(
        params["w3"].astype(jnp.bfloat16))
    b3 = jnp.zeros((1, Op), jnp.float32).at[:, :1].set(params["b3"])

    grid = (Bp // TB,)

    def resident(shape):
        # Parameters: same block for every grid step -> DMA'd once, VMEM-resident.
        return pl.BlockSpec(shape, lambda i: (0, 0))

    flops = 2 * Bp * (Dp * Hp + Hp * Hp + Hp * Op)
    bytes_accessed = (xu_p.size * 2
                      + (w1.size + w2.size + w3.size) * 2
                      + (b1.size + b2.size + b3.size) * 4
                      + Bp * Op * 4)

    out_p = pl.pallas_call(
        _qvalue_kernel,
        out_shape=jax.ShapeDtypeStruct((Bp, Op), jnp.float32),
        grid=grid,
        in_specs=[
            pl.BlockSpec((TB, Dp), lambda i: (i, 0)),   # xu, tiled over batch
            resident((Dp, Hp)), resident((1, Hp)),      # affine1
            resident((Hp, Hp)), resident((1, Hp)),      # affine2
            resident((Hp, Op)), resident((1, Op)),      # value_head (padded to 128)
        ],
        out_specs=pl.BlockSpec((TB, Op), lambda i: (i, 0)),
        compiler_params=pltpu.CompilerParams(
            dimension_semantics=("parallel",),          # megacore on v7x
            vmem_limit_bytes=32 * 1024 * 1024,          # sized for v7x's 64 MiB VMEM
        ),
        cost_estimate=pl.CostEstimate(
            flops=flops,
            transcendentals=2 * Bp * Hp,
            bytes_accessed=bytes_accessed,
        ),
    )(xu_p, w1, b1, w2, b2, w3, b3)

    return out_p[:B, :1]


# ----------------------------- param init ---------------------------------

def init_qvalue_network(key, obs_dim, action_dim, hidden=256):
    """Matches nn.Linear default init; value_head weight*0.1, bias*0."""
    d_in = obs_dim + action_dim
    k1, k2, k3, k4, k5, k6 = jax.random.split(key, 6)

    def linear_init(kw, kb, fan_in, fan_out):
        bound = 1.0 / jnp.sqrt(jnp.float32(fan_in))
        w = jax.random.uniform(kw, (fan_in, fan_out), jnp.float32, -bound, bound)
        b = jax.random.uniform(kb, (1, fan_out), jnp.float32, -bound, bound)
        return w, b

    w1, b1 = linear_init(k1, k2, d_in, hidden)
    w2, b2 = linear_init(k3, k4, hidden, hidden)
    w3, b3 = linear_init(k5, k6, hidden, 1)
    w3 = w3 * 0.1          # value_head.weight.data.mul_(0.1)
    b3 = b3 * 0.0          # value_head.bias.data.mul_(0.0)
    return {"w1": w1, "b1": b1, "w2": w2, "b2": b2, "w3": w3, "b3": b3}


# ----------------------------- reference ----------------------------------

def reference_forward(obs, act, params):
    """Plain-JAX reference with the same bf16-input / f32-accum matmuls."""
    xu = jnp.concatenate([obs, act], axis=-1).astype(jnp.float32)

    def mm(x, w):
        return jnp.dot(x.astype(jnp.bfloat16), w.astype(jnp.bfloat16),
                       preferred_element_type=jnp.float32)

    h = jnp.tanh(mm(xu, params["w1"]) + params["b1"])
    h = jnp.tanh(mm(h, params["w2"]) + params["b2"])
    return mm(h, params["w3"]) + params["b3"]


# ----------------------------- main ----------------------------------------

if __name__ == "__main__":
    key = jax.random.PRNGKey(0)
    kp, ko, ka = jax.random.split(key, 3)

    batch = 8
    obs_dim = 16
    action_dim = 4
    hidden = 64   # small demo config; kernel pads features to 128 lanes

    params = init_qvalue_network(kp, obs_dim, action_dim, hidden)
    obs = jax.random.normal(ko, (batch, obs_dim), dtype=jnp.float32)
    act = jax.random.normal(ka, (batch, action_dim), dtype=jnp.float32)

    q = qvalue_forward(obs, act, params)
    jax.block_until_ready(q)

    q_ref = reference_forward(obs, act, params)
    assert q.shape == (batch, 1)
    assert jnp.allclose(q, q_ref, atol=1e-3, rtol=1e-3)

    print("KERNEL_OK")
</pallas_src>

<mosaic_0001>
module attributes {stable_mosaic.version = 11 : i64} {
  func.func @_qvalue_kernel(%arg0: i32, %arg1: memref<16x128xbf16, #tpu.memory_space<vmem>>, %arg2: memref<128x128xbf16, #tpu.memory_space<vmem>>, %arg3: memref<1x128xf32, #tpu.memory_space<vmem>>, %arg4: memref<128x128xbf16, #tpu.memory_space<vmem>>, %arg5: memref<1x128xf32, #tpu.memory_space<vmem>>, %arg6: memref<128x128xbf16, #tpu.memory_space<vmem>>, %arg7: memref<1x128xf32, #tpu.memory_space<vmem>>, %arg8: memref<16x128xf32, #tpu.memory_space<vmem>>) attributes {dimension_semantics = [#tpu.dimension_semantics<parallel>], iteration_bounds = array<i64: 1>, scalar_prefetch = 0 : i64, scratch_operands = 0 : i64, tpu.core_type = #tpu.core_type<tc>, window_params = [{transform_indices = @transform_0, window_bounds = array<i64: 16, 128>}, {pipeline_mode = #tpu.pipeline_mode<synchronous>, transform_indices = @transform_1, window_bounds = array<i64: 128, 128>}, {pipeline_mode = #tpu.pipeline_mode<synchronous>, transform_indices = @transform_2, window_bounds = array<i64: 1, 128>}, {pipeline_mode = #tpu.pipeline_mode<synchronous>, transform_indices = @transform_3, window_bounds = array<i64: 128, 128>}, {pipeline_mode = #tpu.pipeline_mode<synchronous>, transform_indices = @transform_4, window_bounds = array<i64: 1, 128>}, {pipeline_mode = #tpu.pipeline_mode<synchronous>, transform_indices = @transform_5, window_bounds = array<i64: 128, 128>}, {pipeline_mode = #tpu.pipeline_mode<synchronous>, transform_indices = @transform_6, window_bounds = array<i64: 1, 128>}, {transform_indices = @transform_7, window_bounds = array<i64: 16, 128>}]} {
    %c0 = arith.constant 0 : index
    %c0_0 = arith.constant 0 : index
    %0 = vector.load %arg1[%c0, %c0_0] : memref<16x128xbf16, #tpu.memory_space<vmem>>, vector<16x128xbf16>
    %c0_1 = arith.constant 0 : index
    %c0_2 = arith.constant 0 : index
    %1 = vector.load %arg2[%c0_1, %c0_2] : memref<128x128xbf16, #tpu.memory_space<vmem>>, vector<128x128xbf16>
    %cst = arith.constant dense<0.000000e+00> : vector<16x128xf32>
    %2 = tpu.matmul %0, %1, %cst {dimension_numbers = #tpu.dot_dimension_numbers<[1], [0], [0], [1], [0, 0, 1, 1], [], []>} : vector<16x128xbf16>, vector<128x128xbf16>, vector<16x128xf32> -> vector<16x128xf32>
    %c0_3 = arith.constant 0 : index
    %c0_4 = arith.constant 0 : index
    %3 = vector.load %arg3[%c0_3, %c0_4] : memref<1x128xf32, #tpu.memory_space<vmem>>, vector<1x128xf32>
    %4 = vector.broadcast %3 : vector<1x128xf32> to vector<16x128xf32>
    %5 = arith.addf %2, %4 : vector<16x128xf32>
    %6 = math.tanh %5 : vector<16x128xf32>
    %7 = arith.truncf %6 : vector<16x128xf32> to vector<16x128xbf16>
    %c0_5 = arith.constant 0 : index
    %c0_6 = arith.constant 0 : index
    %8 = vector.load %arg4[%c0_5, %c0_6] : memref<128x128xbf16, #tpu.memory_space<vmem>>, vector<128x128xbf16>
    %cst_7 = arith.constant dense<0.000000e+00> : vector<16x128xf32>
    %9 = tpu.matmul %7, %8, %cst_7 {dimension_numbers = #tpu.dot_dimension_numbers<[1], [0], [0], [1], [0, 0, 1, 1], [], []>} : vector<16x128xbf16>, vector<128x128xbf16>, vector<16x128xf32> -> vector<16x128xf32>
    %c0_8 = arith.constant 0 : index
    %c0_9 = arith.constant 0 : index
    %10 = vector.load %arg5[%c0_8, %c0_9] : memref<1x128xf32, #tpu.memory_space<vmem>>, vector<1x128xf32>
    %11 = vector.broadcast %10 : vector<1x128xf32> to vector<16x128xf32>
    %12 = arith.addf %9, %11 : vector<16x128xf32>
    %13 = math.tanh %12 : vector<16x128xf32>
    %14 = arith.truncf %13 : vector<16x128xf32> to vector<16x128xbf16>
    %c0_10 = arith.constant 0 : index
    %c0_11 = arith.constant 0 : index
    %15 = vector.load %arg6[%c0_10, %c0_11] : memref<128x128xbf16, #tpu.memory_space<vmem>>, vector<128x128xbf16>
    %cst_12 = arith.constant dense<0.000000e+00> : vector<16x128xf32>
    %16 = tpu.matmul %14, %15, %cst_12 {dimension_numbers = #tpu.dot_dimension_numbers<[1], [0], [0], [1], [0, 0, 1, 1], [], []>} : vector<16x128xbf16>, vector<128x128xbf16>, vector<16x128xf32> -> vector<16x128xf32>
    %c0_13 = arith.constant 0 : index
    %c0_14 = arith.constant 0 : index
    %17 = vector.load %arg7[%c0_13, %c0_14] : memref<1x128xf32, #tpu.memory_space<vmem>>, vector<1x128xf32>
    %18 = vector.broadcast %17 : vector<1x128xf32> to vector<16x128xf32>
    %19 = arith.addf %16, %18 : vector<16x128xf32>
    %c0_15 = arith.constant 0 : index
    %c0_16 = arith.constant 0 : index
    %20 = vector.load %arg8[%c0_15, %c0_16] : memref<16x128xf32, #tpu.memory_space<vmem>>, vector<16x128xf32>
    tpu.vector_store %arg8[%c0_15, %c0_16], %19 {strides = array<i32>} : memref<16x128xf32, #tpu.memory_space<vmem>>, vector<16x128xf32>,
    return
  }
  func.func @transform_0(%arg0: i32) -> (i32, i32) {
    %c0_i32 = arith.constant 0 : i32
    %c0_i32_0 = arith.constant 0 : i32
    return %arg0, %c0_i32 : i32, i32
  }
  func.func @transform_1(%arg0: i32) -> (i32, i32) {
    %c0_i32 = arith.constant 0 : i32
    %c0_i32_0 = arith.constant 0 : i32
    %c0_i32_1 = arith.constant 0 : i32
    return %c0_i32, %c0_i32_0 : i32, i32
  }
  func.func @transform_2(%arg0: i32) -> (i32, i32) {
    %c0_i32 = arith.constant 0 : i32
    %c0_i32_0 = arith.constant 0 : i32
    %c0_i32_1 = arith.constant 0 : i32
    return %c0_i32, %c0_i32_0 : i32, i32
  }
  func.func @transform_3(%arg0: i32) -> (i32, i32) {
    %c0_i32 = arith.constant 0 : i32
    %c0_i32_0 = arith.constant 0 : i32
    %c0_i32_1 = arith.constant 0 : i32
    return %c0_i32, %c0_i32_0 : i32, i32
  }
  func.func @transform_4(%arg0: i32) -> (i32, i32) {
    %c0_i32 = arith.constant 0 : i32
    %c0_i32_0 = arith.constant 0 : i32
    %c0_i32_1 = arith.constant 0 : i32
    return %c0_i32, %c0_i32_0 : i32, i32
  }
  func.func @transform_5(%arg0: i32) -> (i32, i32) {
    %c0_i32 = arith.constant 0 : i32
    %c0_i32_0 = arith.constant 0 : i32
    %c0_i32_1 = arith.constant 0 : i32
    return %c0_i32, %c0_i32_0 : i32, i32
  }
  func.func @transform_6(%arg0: i32) -> (i32, i32) {
    %c0_i32 = arith.constant 0 : i32
    %c0_i32_0 = arith.constant 0 : i32
    %c0_i32_1 = arith.constant 0 : i32
    return %c0_i32, %c0_i32_0 : i32, i32
  }
  func.func @transform_7(%arg0: i32) -> (i32, i32) {
    %c0_i32 = arith.constant 0 : i32
    %c0_i32_0 = arith.constant 0 : i32
    return %arg0, %c0_i32 : i32, i32
  }
}

</mosaic_0001>

<llo_original>
// kernel: qvalue_forward.1
$region0: #{qvalue_forward.1}
  #allocation0 [shape = 'u32[]', space=smem, size = 0x4, offset = 0x4, fixed_abs, tag = 'smem constant byte address 0x4 - core index']
  #allocation1 [shape = 'u32[72,128]{1,0:T(1,128)}', space=vmem, size = 0x9000, scoped, tag = 'internal scratch']
  %s0 = inlined_call_operand.vmem [shape: bf16[16,128], index: 0, kind: input, shape index: {}]
  %s1 = inlined_call_operand.vmem [shape: bf16[128,128], index: 1, kind: input, shape index: {}]
  %s2 = inlined_call_operand.vmem [shape: f32[1,128], index: 2, kind: input, shape index: {}]
  %s3 = inlined_call_operand.vmem [shape: bf16[128,128], index: 3, kind: input, shape index: {}]
  %s4 = inlined_call_operand.vmem [shape: f32[1,128], index: 4, kind: input, shape index: {}]
  %s5 = inlined_call_operand.vmem [shape: bf16[128,128], index: 5, kind: input, shape index: {}]
  %s6 = inlined_call_operand.vmem [shape: f32[1,128], index: 6, kind: input, shape index: {}]
  %s7 = inlined_call_operand.vmem [shape: f32[16,128], index: 7, kind: output, shape index: {}]
  %s8 = sld [smem:[#allocation0]]
  $region38: #{qvalue_forward.1} parent=0
    _
  %s10 = ssub.s32 1, %s8
  %s11 = scalar_select 0, %s10, %s8
  // Predicated region
  $region2: #{qvalue_forward.1} parent=0 // pred_check
    _
  $region3: #{qvalue_forward.1} parent=0 // pred_check_branch
    %13 = sbr.rel (0) target = $region5
  $region4: #{qvalue_forward.1} parent=0 // pred_region
    _
  $region5: #{qvalue_forward.1} parent=0 // pred_fallthru
    _
  // Predicated region
  $region6: #{qvalue_forward.1} parent=0 // pred_check
    _
  $region7: #{qvalue_forward.1} parent=0 // pred_check_branch
    %15 = sbr.rel (0) target = $region9
  $region8: #{qvalue_forward.1} parent=0 // pred_region
    _
  $region9: #{qvalue_forward.1} parent=0 // pred_fallthru
    _
  // Predicated region
  $region10: #{qvalue_forward.1} parent=0 // pred_check
    _
  $region11: #{qvalue_forward.1} parent=0 // pred_check_branch
    %17 = sbr.rel (0) target = $region13
  $region12: #{qvalue_forward.1} parent=0 // pred_region
    _
  $region13: #{qvalue_forward.1} parent=0 // pred_fallthru
    _
  // Predicated region
  $region14: #{qvalue_forward.1} parent=0 // pred_check
    _
  $region15: #{qvalue_forward.1} parent=0 // pred_check_branch
    %19 = sbr.rel (0) target = $region17
  $region16: #{qvalue_forward.1} parent=0 // pred_region
    _
  $region17: #{qvalue_forward.1} parent=0 // pred_fallthru
    _
  // Predicated region
  $region18: #{qvalue_forward.1} parent=0 // pred_check
    _
  $region19: #{qvalue_forward.1} parent=0 // pred_check_branch
    %21 = sbr.rel (0) target = $region21
  $region20: #{qvalue_forward.1} parent=0 // pred_region
    _
  $region21: #{qvalue_forward.1} parent=0 // pred_fallthru
    _
  // Predicated region
  $region22: #{qvalue_forward.1} parent=0 // pred_check
    _
  $region23: #{qvalue_forward.1} parent=0 // pred_check_branch
    %23 = sbr.rel (0) target = $region25
  $region24: #{qvalue_forward.1} parent=0 // pred_region
    _
  $region25: #{qvalue_forward.1} parent=0 // pred_fallthru
    _
  // Predicated region
  $region26: #{qvalue_forward.1} parent=0 // pred_check
    _
  $region27: #{qvalue_forward.1} parent=0 // pred_check_branch
    %25 = sbr.rel (0) target = $region29
  $region28: #{qvalue_forward.1} parent=0 // pred_region
    _
  $region29: #{qvalue_forward.1} parent=0 // pred_fallthru
    _
  %v26 = vld [vmem:[%s0] sm:$0xf]
  %v27 = vld [vmem:[%s0 + $0x4] sm:$0xf]
  %v28 = vld [vmem:[%s1] sm:$0xf]
  %v29 = vld [vmem:[%s1 + $0x4] sm:$0xf]
  %v30 = vld [vmem:[%s1 + $0x8] sm:$0xf]
  %v31 = vld [vmem:[%s1 + $0xc] sm:$0xf]
  %v32 = vld [vmem:[%s1 + $0x10] sm:$0xf]
  %v33 = vld [vmem:[%s1 + $0x14] sm:$0xf]
  %v34 = vld [vmem:[%s1 + $0x18] sm:$0xf]
  %v35 = vld [vmem:[%s1 + $0x1c] sm:$0xf]
  %v36 = vld [vmem:[%s1 + $0x20] sm:$0xf]
  %v37 = vld [vmem:[%s1 + $0x24] sm:$0xf]
  %v38 = vld [vmem:[%s1 + $0x28] sm:$0xf]
  %v39 = vld [vmem:[%s1 + $0x2c] sm:$0xf]
  %v40 = vld [vmem:[%s1 + $0x30] sm:$0xf]
  %v41 = vld [vmem:[%s1 + $0x34] sm:$0xf]
  %v42 = vld [vmem:[%s1 + $0x38] sm:$0xf]
  %v43 = vld [vmem:[%s1 + $0x3c] sm:$0xf]
  %v44 = vld [vmem:[%s2] sm:$0x1]
  %v46 = vperm.slane %v44, 0
  %v50 = vunpack.c.l.b16 %v26
  %v51 = vunpack.c.l.b16 %v27
  %v52 = vpack.c.b16 %v51, %v50
  %v70 = vunpack.c.l.b16 %v28
  %v71 = vunpack.c.l.b16 %v29
  %v72 = vunpack.c.l.b16 %v30
  %v73 = vunpack.c.l.b16 %v31
  %v74 = vunpack.c.l.b16 %v32
  %v75 = vunpack.c.l.b16 %v33
  %v76 = vunpack.c.l.b16 %v34
  %v77 = vunpack.c.l.b16 %v35
  %v78 = vunpack.c.l.b16 %v36
  %v79 = vunpack.c.l.b16 %v37
  %v80 = vunpack.c.l.b16 %v38
  %v81 = vunpack.c.l.b16 %v39
  %v82 = vunpack.c.l.b16 %v40
  %v83 = vunpack.c.l.b16 %v41
  %v84 = vunpack.c.l.b16 %v42
  %v85 = vunpack.c.l.b16 %v43
  %v86 = vpack.c.b16 %v71, %v70
  %v87 = vpack.c.b16 %v73, %v72
  %v88 = vpack.c.b16 %v75, %v74
  %v89 = vpack.c.b16 %v77, %v76
  %v90 = vpack.c.b16 %v79, %v78
  %v91 = vpack.c.b16 %v81, %v80
  %v92 = vpack.c.b16 %v83, %v82
  %v93 = vpack.c.b16 %v85, %v84
  %102 = vmatpush.bf16.msra.mxu0 %v93
  %103 = vmatpush.bf16.msra.mxu0 %v92
  %104 = vmatpush.bf16.msra.mxu0 %v91
  %105 = vmatpush.bf16.msra.mxu0 %v90
  %106 = vmatpush.bf16.msra.mxu0 %v89
  %107 = vmatpush.bf16.msra.mxu0 %v88
  %108 = vmatpush.bf16.msra.mxu0 %v87
  %109 = vmatpush.bf16.msra.mxu0 %v86
  %110 = vmatmul.bf16.gmra.mxu0 %v52
  %v111 = vpop.f32.mrf.mxu0
  %v112 = vadd.f32 %v46, %v111
  %v113 = vpop.f32.mrf.mxu0
  %v114 = vadd.f32 %v46, %v113
  %115 = vdwg.mxu0
  %v116 = vtanh.pop %v112
  %v117 = vtanh.pop %v114
  %v118 = vpack.c.bf16 %v117, %v116
  %v119 = vld [vmem:[%s3] sm:$0xf]
  %v120 = vld [vmem:[%s3 + $0x4] sm:$0xf]
  %v121 = vld [vmem:[%s3 + $0x8] sm:$0xf]
  %v122 = vld [vmem:[%s3 + $0xc] sm:$0xf]
  %v123 = vld [vmem:[%s3 + $0x10] sm:$0xf]
  %v124 = vld [vmem:[%s3 + $0x14] sm:$0xf]
  %v125 = vld [vmem:[%s3 + $0x18] sm:$0xf]
  %v126 = vld [vmem:[%s3 + $0x1c] sm:$0xf]
  %v127 = vld [vmem:[%s3 + $0x20] sm:$0xf]
  %v128 = vld [vmem:[%s3 + $0x24] sm:$0xf]
  %v129 = vld [vmem:[%s3 + $0x28] sm:$0xf]
  %v130 = vld [vmem:[%s3 + $0x2c] sm:$0xf]
  %v131 = vld [vmem:[%s3 + $0x30] sm:$0xf]
  %v132 = vld [vmem:[%s3 + $0x34] sm:$0xf]
  %v133 = vld [vmem:[%s3 + $0x38] sm:$0xf]
  %v134 = vld [vmem:[%s3 + $0x3c] sm:$0xf]
  %v135 = vld [vmem:[%s4] sm:$0x1]
  %v137 = vperm.slane %v135, 0
  %v155 = vunpack.c.l.b16 %v119
  %v156 = vunpack.c.l.b16 %v120
  %v157 = vunpack.c.l.b16 %v121
  %v158 = vunpack.c.l.b16 %v122
  %v159 = vunpack.c.l.b16 %v123
  %v160 = vunpack.c.l.b16 %v124
  %v161 = vunpack.c.l.b16 %v125
  %v162 = vunpack.c.l.b16 %v126
  %v163 = vunpack.c.l.b16 %v127
  %v164 = vunpack.c.l.b16 %v128
  %v165 = vunpack.c.l.b16 %v129
  %v166 = vunpack.c.l.b16 %v130
  %v167 = vunpack.c.l.b16 %v131
  %v168 = vunpack.c.l.b16 %v132
  %v169 = vunpack.c.l.b16 %v133
  %v170 = vunpack.c.l.b16 %v134
  %v171 = vpack.c.b16 %v156, %v155
  %v172 = vpack.c.b16 %v158, %v157
  %v173 = vpack.c.b16 %v160, %v159
  %v174 = vpack.c.b16 %v162, %v161
  %v175 = vpack.c.b16 %v164, %v163
  %v176 = vpack.c.b16 %v166, %v165
  %v177 = vpack.c.b16 %v168, %v167
  %v178 = vpack.c.b16 %v170, %v169
  %187 = vmatpush.bf16.msra.mxu0 %v178
  %188 = vmatpush.bf16.msra.mxu0 %v177
  %189 = vmatpush.bf16.msra.mxu0 %v176
  %190 = vmatpush.bf16.msra.mxu0 %v175
  %191 = vmatpush.bf16.msra.mxu0 %v174
  %192 = vmatpush.bf16.msra.mxu0 %v173
  %193 = vmatpush.bf16.msra.mxu0 %v172
  %194 = vmatpush.bf16.msra.mxu0 %v171
  %195 = vmatmul.bf16.gmra.mxu0 %v118
  %v196 = vpop.f32.mrf.mxu0
  %v197 = vadd.f32 %v137, %v196
  %v198 = vpop.f32.mrf.mxu0
  %v199 = vadd.f32 %v137, %v198
  %200 = vdwg.mxu0
  %v201 = vtanh.pop %v197
  %v202 = vtanh.pop %v199
  %v203 = vpack.c.bf16 %v202, %v201
  %v204 = vld [vmem:[%s5] sm:$0xf]
  %v205 = vld [vmem:[%s5 + $0x4] sm:$0xf]
  %v206 = vld [vmem:[%s5 + $0x8] sm:$0xf]
  %v207 = vld [vmem:[%s5 + $0xc] sm:$0xf]
  %v208 = vld [vmem:[%s5 + $0x10] sm:$0xf]
  %v209 = vld [vmem:[%s5 + $0x14] sm:$0xf]
  %v210 = vld [vmem:[%s5 + $0x18] sm:$0xf]
  %v211 = vld [vmem:[%s5 + $0x1c] sm:$0xf]
  %v212 = vld [vmem:[%s5 + $0x20] sm:$0xf]
  %v213 = vld [vmem:[%s5 + $0x24] sm:$0xf]
  %v214 = vld [vmem:[%s5 + $0x28] sm:$0xf]
  %v215 = vld [vmem:[%s5 + $0x2c] sm:$0xf]
  %v216 = vld [vmem:[%s5 + $0x30] sm:$0xf]
  %v217 = vld [vmem:[%s5 + $0x34] sm:$0xf]
  %v218 = vld [vmem:[%s5 + $0x38] sm:$0xf]
  %v219 = vld [vmem:[%s5 + $0x3c] sm:$0xf]
  %v220 = vld [vmem:[%s6] sm:$0x1]
  %v222 = vperm.slane %v220, 0
  %v240 = vunpack.c.l.b16 %v204
  %v241 = vunpack.c.l.b16 %v205
  %v242 = vunpack.c.l.b16 %v206
  %v243 = vunpack.c.l.b16 %v207
  %v244 = vunpack.c.l.b16 %v208
  %v245 = vunpack.c.l.b16 %v209
  %v246 = vunpack.c.l.b16 %v210
  %v247 = vunpack.c.l.b16 %v211
  %v248 = vunpack.c.l.b16 %v212
  %v249 = vunpack.c.l.b16 %v213
  %v250 = vunpack.c.l.b16 %v214
  %v251 = vunpack.c.l.b16 %v215
  %v252 = vunpack.c.l.b16 %v216
  %v253 = vunpack.c.l.b16 %v217
  %v254 = vunpack.c.l.b16 %v218
  %v255 = vunpack.c.l.b16 %v219
  %v256 = vpack.c.b16 %v241, %v240
  %v257 = vpack.c.b16 %v243, %v242
  %v258 = vpack.c.b16 %v245, %v244
  %v259 = vpack.c.b16 %v247, %v246
  %v260 = vpack.c.b16 %v249, %v248
  %v261 = vpack.c.b16 %v251, %v250
  %v262 = vpack.c.b16 %v253, %v252
  %v263 = vpack.c.b16 %v255, %v254
  %272 = vmatpush.bf16.msra.mxu0 %v263
  %273 = vmatpush.bf16.msra.mxu0 %v262
  %274 = vmatpush.bf16.msra.mxu0 %v261
  %275 = vmatpush.bf16.msra.mxu0 %v260
  %276 = vmatpush.bf16.msra.mxu0 %v259
  %277 = vmatpush.bf16.msra.mxu0 %v258
  %278 = vmatpush.bf16.msra.mxu0 %v257
  %279 = vmatpush.bf16.msra.mxu0 %v256
  %280 = vmatmul.bf16.gmra.mxu0 %v203
  %v281 = vpop.f32.mrf.mxu0
  %v282 = vadd.f32 %v222, %v281
  %v283 = vpop.f32.mrf.mxu0
  %v284 = vadd.f32 %v222, %v283
  %285 = vdwg.mxu0
  %286 = vst [vmem:[%s7] sm:$0xff] %v282
  %287 = vst [vmem:[%s7 + $0x8] sm:$0xff] %v284
  // Predicated region
  $region30: #{qvalue_forward.1} parent=0 // pred_check
    _
  $region31: #{qvalue_forward.1} parent=0 // pred_check_branch
    %289 = sbr.rel (0) target = $region33
  $region32: #{qvalue_forward.1} parent=0 // pred_region
    _
  $region33: #{qvalue_forward.1} parent=0 // pred_fallthru
    _
  // Predicated region
  $region34: #{qvalue_forward.1} parent=0 // pred_check
    _
  $region35: #{qvalue_forward.1} parent=0 // pred_check_branch
    %291 = sbr.rel (0) target = $region37
  $region36: #{qvalue_forward.1} parent=0 // pred_region
    _
  $region37: #{qvalue_forward.1} parent=0 // pred_fallthru
    _

</llo_original>
